<compile_context>
chip_gen: v6e
topology: v6e:2x2x1
jax: 0.10.0
libtpu: 0.0.40
codegen_flags: <defaults>
</compile_context>

<pallas_src>
import jax
import jax.numpy as jnp
from jax.experimental import pallas as pl
from jax.experimental.pallas import tpu as pltpu

LN_EPS = 1e-5  # nn.LayerNorm default eps


def column_predictor_kernel(x_ref, w_ref, b_ref, gamma_ref, beta_ref,
                            w1_ref, b1_ref, out_ref):
    f32 = jnp.float32

    # --- encoders + cat + fc, pre-composed: one MXU pass, f32 accumulation ---
    h = jnp.dot(x_ref[...], w_ref[...], preferred_element_type=f32) + b_ref[...]

    # --- self.layer_norm over the last dim (f32 on VPU/XLU/EUP) --------------
    mean = jnp.mean(h, axis=-1, keepdims=True)
    var = jnp.mean(jnp.square(h - mean), axis=-1, keepdims=True)
    hn = (h - mean) * jax.lax.rsqrt(var + LN_EPS) * gamma_ref[...] + beta_ref[...]

    # --- tanh (EUP) -----------------------------------------------------------
    t = jnp.tanh(hn)

    # --- self.fc1 as (1,D) x (tb,D)^T -> lane-dense (1, tb) logit row ---------
    # Contracting over D directly on the MXU yields the transposed (row-major,
    # lane-dense) layout for free: no (tb,1) masked stores, no extra transpose.
    logit = jax.lax.dot_general(
        w1_ref[...], t,
        dimension_numbers=(((1,), (1,)), ((), ())),
        preferred_element_type=f32) + b1_ref[...]

    # --- sigmoid: overflow-safe tanh identity (EUP), == jax.nn.sigmoid --------
    out_ref[...] = 0.5 * (jnp.tanh(0.5 * logit) + 1.0)


def column_predictor(question, column, params, *, block_b=1024,
                     matmul_dtype=jnp.bfloat16):
    """Full ColumnPredictor forward in one pallas_call, gridded over batch.

    Weights/biases use constant index_maps (VMEM-resident across grid steps);
    the concatenated activation stream is tiled in `block_b`-row blocks.
    `matmul_dtype` narrows only the MXU inputs (f32 accumulation); the
    elementwise tail stays f32.  Pass matmul_dtype=jnp.float32 for full f32.
    """
    question = jnp.asarray(question, jnp.float32)
    column = jnp.asarray(column, jnp.float32)
    B = question.shape[0]
    D = params["wfc"].shape[1]

    # ---- host-side weight composition (encoders are Linear stand-ins) -------
    wfc_q = params["wfc"][:D, :]          # multiplies the question half of cat
    wfc_c = params["wfc"][D:, :]          # multiplies the column half of cat
    w_comp = jnp.concatenate([params["wq"] @ wfc_q,
                              params["wc"] @ wfc_c], axis=0)     # (Qin+Cin, D)
    b_comp = params["bq"] @ wfc_q + params["bc"] @ wfc_c + params["bfc"]  # (1,D)
    w1_row = params["wfc1"].reshape(1, D)

    # ---- single concatenated activation stream, padded + cast ---------------
    x = jnp.concatenate([question, column], axis=1)               # (B, Qin+Cin)
    tb = B if B <= block_b else block_b
    nblk = pl.cdiv(B, tb)
    b_pad = nblk * tb
    if b_pad != B:
        x = jnp.pad(x, ((0, b_pad - B), (0, 0)))  # zero rows: benign, trimmed
    mm_dtype = jnp.float32 if matmul_dtype is None else matmul_dtype
    x = x.astype(mm_dtype)
    w_comp = w_comp.astype(mm_dtype)

    def resident(arr):
        zeros = (0,) * arr.ndim
        return pl.BlockSpec(arr.shape, lambda i, _z=zeros: _z)

    weights = (w_comp, b_comp, params["gamma"], params["beta"],
               w1_row, params["bfc1"])

    out_row = pl.pallas_call(
        column_predictor_kernel,
        out_shape=jax.ShapeDtypeStruct((1, b_pad), jnp.float32),
        grid=(nblk,),
        in_specs=[pl.BlockSpec((tb, x.shape[1]), lambda i: (i, 0))]
                 + [resident(a) for a in weights],
        # Lane-dense output slab: each grid step stores a (1, tb) row block.
        out_specs=pl.BlockSpec((1, tb), lambda i: (0, i)),
        compiler_params=pltpu.CompilerParams(
            dimension_semantics=("parallel",)),   # lets v7x split batch on 2 TCs
    )(x, *weights)

    return out_row[0, :B].reshape(B, 1)


def init_params(key, q_in, c_in, output_size):
    """Deterministic parameter init. Linear weights are stored pre-transposed
    as (in, out) so matmuls are plain row-major."""
    D = output_size // 4        # encoder output width == fc output width
    H = output_size // 2        # concat width == fc input width
    ks = jax.random.split(key, 8)
    scale = 0.1
    return {
        "wq":    scale * jax.random.normal(ks[0], (q_in, D), jnp.float32),
        "bq":    scale * jax.random.normal(ks[1], (1, D), jnp.float32),
        "wc":    scale * jax.random.normal(ks[2], (c_in, D), jnp.float32),
        "bc":    scale * jax.random.normal(ks[3], (1, D), jnp.float32),
        "wfc":   scale * jax.random.normal(ks[4], (H, D), jnp.float32),
        "bfc":   scale * jax.random.normal(ks[5], (1, D), jnp.float32),
        "gamma": jnp.ones((1, D), jnp.float32),   # LayerNorm weight init
        "beta":  jnp.zeros((1, D), jnp.float32),  # LayerNorm bias init
        "wfc1":  scale * jax.random.normal(ks[6], (D, 1), jnp.float32),
        "bfc1":  scale * jax.random.normal(ks[7], (1, 1), jnp.float32),
    }


def reference_forward(question, column, params):
    """Pure-JAX reference of the unfused module math (encoders, cat, fc, LN,
    tanh, fc1, sigmoid) for correctness checks."""
    out1 = question @ params["wq"] + params["bq"]
    out2 = column @ params["wc"] + params["bc"]
    mul = jnp.concatenate([out1, out2], axis=1)
    h = mul @ params["wfc"] + params["bfc"]
    mean = h.mean(-1, keepdims=True)
    var = ((h - mean) ** 2).mean(-1, keepdims=True)
    hn = (h - mean) / jnp.sqrt(var + LN_EPS) * params["gamma"] + params["beta"]
    t = jnp.tanh(hn)
    logit = t @ params["wfc1"] + params["bfc1"]
    return jax.nn.sigmoid(logit)


if __name__ == "__main__":
    key = jax.random.PRNGKey(0)
    kq, kc, kp, kq2, kc2 = jax.random.split(key, 5)

    B = 2              # batch
    Q_IN = 32          # question feature width
    C_IN = 32          # column feature width
    OUTPUT_SIZE = 64   # -> fc: 32 -> 16, fc1: 16 -> 1

    question = jax.random.normal(kq, (B, Q_IN), jnp.float32)
    column = jax.random.normal(kc, (B, C_IN), jnp.float32)
    params = init_params(kp, Q_IN, C_IN, OUTPUT_SIZE)
    ref = reference_forward(question, column, params)

    # Small-batch path (single block), f32 MXU inputs: tight-ish tolerance.
    out_f32 = jax.block_until_ready(
        column_predictor(question, column, params, matmul_dtype=jnp.float32))
    assert out_f32.shape == (B, 1)
    assert jnp.allclose(out_f32, ref, atol=5e-3, rtol=5e-3)

    # Default path: bf16 MXU inputs, f32 accumulation + f32 tail.
    out_bf16 = jax.block_until_ready(column_predictor(question, column, params))
    assert out_bf16.shape == (B, 1)
    assert bool(jnp.all(jnp.isfinite(out_bf16)))
    assert jnp.allclose(out_bf16, ref, atol=5e-2)

    # Larger, non-divisible batch: exercises padding, the batch grid with
    # VMEM-resident weights, and the lane-dense (1, tb) output blocks.
    B2 = 2500
    question2 = jax.random.normal(kq2, (B2, Q_IN), jnp.float32)
    column2 = jax.random.normal(kc2, (B2, C_IN), jnp.float32)
    out2 = jax.block_until_ready(column_predictor(question2, column2, params))
    ref2 = reference_forward(question2, column2, params)
    assert out2.shape == (B2, 1)
    assert jnp.allclose(out2, ref2, atol=5e-2)

    print("KERNEL_OK")
</pallas_src>

<mosaic_0001>
module attributes {stable_mosaic.version = 11 : i64} {
  func.func @column_predictor_kernel(%arg0: i32, %arg1: memref<2x64xf32, #tpu.memory_space<vmem>>, %arg2: memref<64x16xf32, #tpu.memory_space<vmem>>, %arg3: memref<1x16xf32, #tpu.memory_space<vmem>>, %arg4: memref<1x16xf32, #tpu.memory_space<vmem>>, %arg5: memref<1x16xf32, #tpu.memory_space<vmem>>, %arg6: memref<1x16xf32, #tpu.memory_space<vmem>>, %arg7: memref<1x1xf32, #tpu.memory_space<vmem>>, %arg8: memref<1x2xf32, #tpu.memory_space<vmem>>) attributes {dimension_semantics = [#tpu.dimension_semantics<parallel>], iteration_bounds = array<i64: 1>, scalar_prefetch = 0 : i64, scratch_operands = 0 : i64, tpu.core_type = #tpu.core_type<tc>, window_params = [{transform_indices = @transform_0, window_bounds = array<i64: 2, 64>}, {pipeline_mode = #tpu.pipeline_mode<synchronous>, transform_indices = @transform_1, window_bounds = array<i64: 64, 16>}, {pipeline_mode = #tpu.pipeline_mode<synchronous>, transform_indices = @transform_2, window_bounds = array<i64: 1, 16>}, {pipeline_mode = #tpu.pipeline_mode<synchronous>, transform_indices = @transform_3, window_bounds = array<i64: 1, 16>}, {pipeline_mode = #tpu.pipeline_mode<synchronous>, transform_indices = @transform_4, window_bounds = array<i64: 1, 16>}, {pipeline_mode = #tpu.pipeline_mode<synchronous>, transform_indices = @transform_5, window_bounds = array<i64: 1, 16>}, {pipeline_mode = #tpu.pipeline_mode<synchronous>, transform_indices = @transform_6, window_bounds = array<i64: 1, 1>}, {transform_indices = @transform_7, window_bounds = array<i64: 1, 2>}]} {
    %c0 = arith.constant 0 : index
    %c0_0 = arith.constant 0 : index
    %0 = vector.load %arg1[%c0, %c0_0] : memref<2x64xf32, #tpu.memory_space<vmem>>, vector<2x64xf32>
    %c0_1 = arith.constant 0 : index
    %c0_2 = arith.constant 0 : index
    %1 = vector.load %arg2[%c0_1, %c0_2] : memref<64x16xf32, #tpu.memory_space<vmem>>, vector<64x16xf32>
    %cst = arith.constant dense<0.000000e+00> : vector<2x16xf32>
    %2 = tpu.matmul %0, %1, %cst {dimension_numbers = #tpu.dot_dimension_numbers<[1], [0], [0], [1], [0, 0, 1, 1], [], []>} : vector<2x64xf32>, vector<64x16xf32>, vector<2x16xf32> -> vector<2x16xf32>
    %c0_3 = arith.constant 0 : index
    %c0_4 = arith.constant 0 : index
    %3 = vector.load %arg3[%c0_3, %c0_4] : memref<1x16xf32, #tpu.memory_space<vmem>>, vector<1x16xf32>
    %4 = vector.broadcast %3 : vector<1x16xf32> to vector<2x16xf32>
    %5 = arith.addf %2, %4 : vector<2x16xf32>
    %cst_5 = arith.constant dense<0.000000e+00> : vector<2xf32>
    %6 = vector.multi_reduction <add>, %5, %cst_5 [1] : vector<2x16xf32> to vector<2xf32>
    %7 = vector.shape_cast %6 : vector<2xf32> to vector<2x1xf32>
    %cst_6 = arith.constant 1.600000e+01 : f32
    %8 = vector.broadcast %cst_6 : f32 to vector<2x1xf32>
    %9 = arith.divf %7, %8 : vector<2x1xf32>
    %10 = vector.broadcast %9 : vector<2x1xf32> to vector<2x16xf32>
    %11 = arith.subf %5, %10 : vector<2x16xf32>
    %12 = arith.mulf %11, %11 : vector<2x16xf32>
    %cst_7 = arith.constant dense<0.000000e+00> : vector<2xf32>
    %13 = vector.multi_reduction <add>, %12, %cst_7 [1] : vector<2x16xf32> to vector<2xf32>
    %14 = vector.shape_cast %13 : vector<2xf32> to vector<2x1xf32>
    %cst_8 = arith.constant 1.600000e+01 : f32
    %15 = vector.broadcast %cst_8 : f32 to vector<2x1xf32>
    %16 = arith.divf %14, %15 : vector<2x1xf32>
    %17 = vector.broadcast %9 : vector<2x1xf32> to vector<2x16xf32>
    %18 = arith.subf %5, %17 : vector<2x16xf32>
    %cst_9 = arith.constant 9.99999974E-6 : f32
    %19 = vector.broadcast %cst_9 : f32 to vector<2x1xf32>
    %20 = arith.addf %16, %19 : vector<2x1xf32>
    %21 = math.rsqrt %20 : vector<2x1xf32>
    %22 = vector.broadcast %21 : vector<2x1xf32> to vector<2x16xf32>
    %23 = arith.mulf %18, %22 : vector<2x16xf32>
    %c0_10 = arith.constant 0 : index
    %c0_11 = arith.constant 0 : index
    %24 = vector.load %arg4[%c0_10, %c0_11] : memref<1x16xf32, #tpu.memory_space<vmem>>, vector<1x16xf32>
    %25 = vector.broadcast %24 : vector<1x16xf32> to vector<2x16xf32>
    %26 = arith.mulf %23, %25 : vector<2x16xf32>
    %c0_12 = arith.constant 0 : index
    %c0_13 = arith.constant 0 : index
    %27 = vector.load %arg5[%c0_12, %c0_13] : memref<1x16xf32, #tpu.memory_space<vmem>>, vector<1x16xf32>
    %28 = vector.broadcast %27 : vector<1x16xf32> to vector<2x16xf32>
    %29 = arith.addf %26, %28 : vector<2x16xf32>
    %30 = math.tanh %29 : vector<2x16xf32>
    %c0_14 = arith.constant 0 : index
    %c0_15 = arith.constant 0 : index
    %31 = vector.load %arg6[%c0_14, %c0_15] : memref<1x16xf32, #tpu.memory_space<vmem>>, vector<1x16xf32>
    %cst_16 = arith.constant dense<0.000000e+00> : vector<1x2xf32>
    %32 = tpu.matmul %31, %30, %cst_16 {dimension_numbers = #tpu.dot_dimension_numbers<[1], [1], [0], [0], [0, 0, 1, 0], [], []>} : vector<1x16xf32>, vector<2x16xf32>, vector<1x2xf32> -> vector<1x2xf32>
    %c0_17 = arith.constant 0 : index
    %c0_18 = arith.constant 0 : index
    %33 = vector.load %arg7[%c0_17, %c0_18] : memref<1x1xf32, #tpu.memory_space<vmem>>, vector<1x1xf32>
    %34 = vector.broadcast %33 : vector<1x1xf32> to vector<1x2xf32>
    %35 = arith.addf %32, %34 : vector<1x2xf32>
    %cst_19 = arith.constant 5.000000e-01 : f32
    %36 = vector.broadcast %cst_19 : f32 to vector<1x2xf32>
    %37 = arith.mulf %36, %35 : vector<1x2xf32>
    %38 = math.tanh %37 : vector<1x2xf32>
    %cst_20 = arith.constant 1.000000e+00 : f32
    %39 = vector.broadcast %cst_20 : f32 to vector<1x2xf32>
    %40 = arith.addf %38, %39 : vector<1x2xf32>
    %cst_21 = arith.constant 5.000000e-01 : f32
    %41 = vector.broadcast %cst_21 : f32 to vector<1x2xf32>
    %42 = arith.mulf %41, %40 : vector<1x2xf32>
    %c0_22 = arith.constant 0 : index
    %c0_23 = arith.constant 0 : index
    %43 = vector.load %arg8[%c0_22, %c0_23] : memref<1x2xf32, #tpu.memory_space<vmem>>, vector<1x2xf32>
    tpu.vector_store %arg8[%c0_22, %c0_23], %42 {strides = array<i32>} : memref<1x2xf32, #tpu.memory_space<vmem>>, vector<1x2xf32>,
    return
  }
  func.func @transform_0(%arg0: i32) -> (i32, i32) {
    %c0_i32 = arith.constant 0 : i32
    %c0_i32_0 = arith.constant 0 : i32
    return %arg0, %c0_i32 : i32, i32
  }
  func.func @transform_1(%arg0: i32) -> (i32, i32) {
    %c0_i32 = arith.constant 0 : i32
    %c0_i32_0 = arith.constant 0 : i32
    %c0_i32_1 = arith.constant 0 : i32
    return %c0_i32, %c0_i32_0 : i32, i32
  }
  func.func @transform_2(%arg0: i32) -> (i32, i32) {
    %c0_i32 = arith.constant 0 : i32
    %c0_i32_0 = arith.constant 0 : i32
    %c0_i32_1 = arith.constant 0 : i32
    return %c0_i32, %c0_i32_0 : i32, i32
  }
  func.func @transform_3(%arg0: i32) -> (i32, i32) {
    %c0_i32 = arith.constant 0 : i32
    %c0_i32_0 = arith.constant 0 : i32
    %c0_i32_1 = arith.constant 0 : i32
    return %c0_i32, %c0_i32_0 : i32, i32
  }
  func.func @transform_4(%arg0: i32) -> (i32, i32) {
    %c0_i32 = arith.constant 0 : i32
    %c0_i32_0 = arith.constant 0 : i32
    %c0_i32_1 = arith.constant 0 : i32
    return %c0_i32, %c0_i32_0 : i32, i32
  }
  func.func @transform_5(%arg0: i32) -> (i32, i32) {
    %c0_i32 = arith.constant 0 : i32
    %c0_i32_0 = arith.constant 0 : i32
    %c0_i32_1 = arith.constant 0 : i32
    return %c0_i32, %c0_i32_0 : i32, i32
  }
  func.func @transform_6(%arg0: i32) -> (i32, i32) {
    %c0_i32 = arith.constant 0 : i32
    %c0_i32_0 = arith.constant 0 : i32
    %c0_i32_1 = arith.constant 0 : i32
    return %c0_i32, %c0_i32_0 : i32, i32
  }
  func.func @transform_7(%arg0: i32) -> (i32, i32) {
    %c0_i32 = arith.constant 0 : i32
    %c0_i32_0 = arith.constant 0 : i32
    return %c0_i32, %arg0 : i32, i32
  }
}

</mosaic_0001>

<llo_original>
// kernel: tpu_custom_call.1
$region0: #{tpu_custom_call.1}
  #allocation0 [shape = 'u32[]', space=smem, size = 0x4, offset = 0x4, fixed_abs, tag = 'smem constant byte address 0x4 - core index']
  #allocation1 [shape = 'u32[144,128]{1,0:T(1,128)}', space=vmem, size = 0x12000, scoped, tag = 'internal scratch']
  #allocation2 [shape = 'f32[1,1]{1,0:T(1,128)S(1)}', space=vmem, size = 0x200, scoped, tag = 'scoped memory for tpu_custom_call.1']
  %s0 = inlined_call_operand.vmem [shape: f32[2,64], index: 0, kind: input, shape index: {}]
  %s1 = inlined_call_operand.vmem [shape: f32[64,16], index: 1, kind: input, shape index: {}]
  %s2 = inlined_call_operand.vmem [shape: f32[1,16], index: 2, kind: input, shape index: {}]
  %s3 = inlined_call_operand.vmem [shape: f32[1,16], index: 3, kind: input, shape index: {}]
  %s4 = inlined_call_operand.vmem [shape: f32[1,16], index: 4, kind: input, shape index: {}]
  %s5 = inlined_call_operand.vmem [shape: f32[1,16], index: 5, kind: input, shape index: {}]
  %s6 = inlined_call_operand.<no memory space> [shape: f32[1,1], index: 6, kind: input, shape index: {}]
  %s7 = inlined_call_operand.hbm [shape: f32[1,2], index: 7, kind: output, shape index: {}]
  %s8 = sld [smem:[#allocation0]]
  $region38: #{tpu_custom_call.1} parent=0
    _
  %s10 = ssub.s32 1, %s8
  %s11 = scalar_select 0, %s10, %s8
  %v12 = vstv %s6
  %13 = vst [vmem:[#allocation2] sm:$0x1] %v12
  $region1: #{tpu_custom_call.1} parent=0
    #allocation3 [shape = 'u8[512]{0}', space=vmem, size = 0x400, scoped, tag = 'output window, operand 0, single buffered']
    #allocation4 [shape = 's32[1]{0}', space=sflag, size = 0x4, scoped, tag = 'scoped memory for tpu_custom_call.1']
    %14 = vsyncpa [#allocation4], 0
    // Predicated region
    $region2: #{tpu_custom_call.1} parent=1 // pred_check
      _
    $region3: #{tpu_custom_call.1} parent=1 // pred_check_branch
      %16 = sbr.rel (0) target = $region5
    $region4: #{tpu_custom_call.1} parent=1 // pred_region
      _
    $region5: #{tpu_custom_call.1} parent=1 // pred_fallthru
      _
    // Predicated region
    $region6: #{tpu_custom_call.1} parent=1 // pred_check
      _
    $region7: #{tpu_custom_call.1} parent=1 // pred_check_branch
      %18 = sbr.rel (0) target = $region9
    $region8: #{tpu_custom_call.1} parent=1 // pred_region
      _
    $region9: #{tpu_custom_call.1} parent=1 // pred_fallthru
      _
    // Predicated region
    $region10: #{tpu_custom_call.1} parent=1 // pred_check
      _
    $region11: #{tpu_custom_call.1} parent=1 // pred_check_branch
      %20 = sbr.rel (0) target = $region13
    $region12: #{tpu_custom_call.1} parent=1 // pred_region
      _
    $region13: #{tpu_custom_call.1} parent=1 // pred_fallthru
      _
    // Predicated region
    $region14: #{tpu_custom_call.1} parent=1 // pred_check
      _
    $region15: #{tpu_custom_call.1} parent=1 // pred_check_branch
      %22 = sbr.rel (0) target = $region17
    $region16: #{tpu_custom_call.1} parent=1 // pred_region
      _
    $region17: #{tpu_custom_call.1} parent=1 // pred_fallthru
      _
    // Predicated region
    $region18: #{tpu_custom_call.1} parent=1 // pred_check
      _
    $region19: #{tpu_custom_call.1} parent=1 // pred_check_branch
      %24 = sbr.rel (0) target = $region21
    $region20: #{tpu_custom_call.1} parent=1 // pred_region
      _
    $region21: #{tpu_custom_call.1} parent=1 // pred_fallthru
      _
    // Predicated region
    $region22: #{tpu_custom_call.1} parent=1 // pred_check
      _
    $region23: #{tpu_custom_call.1} parent=1 // pred_check_branch
      %26 = sbr.rel (0) target = $region25
    $region24: #{tpu_custom_call.1} parent=1 // pred_region
      _
    $region25: #{tpu_custom_call.1} parent=1 // pred_fallthru
      _
    // Predicated region
    $region26: #{tpu_custom_call.1} parent=1 // pred_check
      _
    $region27: #{tpu_custom_call.1} parent=1 // pred_check_branch
      %28 = sbr.rel (0) target = $region29
    $region28: #{tpu_custom_call.1} parent=1 // pred_region
      _
    $region29: #{tpu_custom_call.1} parent=1 // pred_fallthru
      _
    %v29 = vld [vmem:[%s0] sm:$0x3]
    %v30 = vld [vmem:[%s1] sm:$0xff]
    %v31 = vld [vmem:[%s1 + $0x8] sm:$0xff]
    %v32 = vld [vmem:[%s1 + $0x10] sm:$0xff]
    %v33 = vld [vmem:[%s1 + $0x18] sm:$0xff]
    %v34 = vld [vmem:[%s1 + $0x20] sm:$0xff]
    %v35 = vld [vmem:[%s1 + $0x28] sm:$0xff]
    %v36 = vld [vmem:[%s1 + $0x30] sm:$0xff]
    %v37 = vld [vmem:[%s1 + $0x38] sm:$0xff]
    %v38 = vld [vmem:[%s2] sm:$0x1]
    %v40 = vlaneseq
    %v41 = vshrl.u32 %v40, 7
    %v42 = vsub.s32 0, %v41
    %v43 = vrot.slane %v38, %v42
    %vm45 = vcmask 523264
    %v47 = vsel %vm45, %v29, 0
    %49 = vmatprep.subr.mxu0 0.0
    %50 = vmatpush1.msra.mxu0 0.0
    %51 = vmatprep.subr.mxu0 0.0
    %52 = vmatpush1.msra.mxu0 0.0
    %53 = vmatprep.subr.mxu0 0.0
    %54 = vmatpush1.msra.mxu0 0.0
    %55 = vmatprep.subr.mxu0 0.0
    %56 = vmatpush1.msra.mxu0 0.0
    %57 = vmatprep.subr.mxu0 0.0
    %58 = vmatpush1.msra.mxu0 0.0
    %59 = vmatprep.subr.mxu0 0.0
    %60 = vmatpush1.msra.mxu0 0.0
    %61 = vmatprep.subr.mxu0 0.0
    %62 = vmatpush1.msra.mxu0 0.0
    %63 = vmatprep.subr.mxu0 0.0
    %64 = vmatpush1.msra.mxu0 0.0
    %65 = vmatprep.subr.mxu0 0.0
    %66 = vmatpush1.msra.mxu0 %v37
    %67 = vmatprep.subr.mxu0 0.0
    %68 = vmatpush1.msra.mxu0 %v36
    %69 = vmatprep.subr.mxu0 0.0
    %70 = vmatpush1.msra.mxu0 %v35
    %71 = vmatprep.subr.mxu0 0.0
    %72 = vmatpush1.msra.mxu0 %v34
    %73 = vmatprep.subr.mxu0 0.0
    %74 = vmatpush1.msra.mxu0 %v33
    %75 = vmatprep.subr.mxu0 0.0
    %76 = vmatpush1.msra.mxu0 %v32
    %77 = vmatprep.subr.mxu0 0.0
    %78 = vmatpush1.msra.mxu0 %v31
    %79 = vmatprep.subr.mxu0 0.0
    %80 = vmatpush1.msra.mxu0 %v30
    %81 = vmatprep.subr.mxu0 0.0
    %82 = vmatpush2.msra.mxu0 0.0
    %83 = vmatprep.subr.mxu0 0.0
    %84 = vmatpush2.msra.mxu0 0.0
    %85 = vmatprep.subr.mxu0 0.0
    %86 = vmatpush2.msra.mxu0 0.0
    %87 = vmatprep.subr.mxu0 0.0
    %88 = vmatpush2.msra.mxu0 0.0
    %89 = vmatprep.subr.mxu0 0.0
    %90 = vmatpush2.msra.mxu0 0.0
    %91 = vmatprep.subr.mxu0 0.0
    %92 = vmatpush2.msra.mxu0 0.0
    %93 = vmatprep.subr.mxu0 0.0
    %94 = vmatpush2.msra.mxu0 0.0
    %95 = vmatprep.subr.mxu0 0.0
    %96 = vmatpush2.msra.mxu0 0.0
    %97 = vmatprep.subr.mxu0 0.0
    %98 = vmatpush2.msra.mxu0 0.0
    %99 = vmatprep.subr.mxu0 0.0
    %100 = vmatpush2.msra.mxu0 0.0
    %101 = vmatprep.subr.mxu0 0.0
    %102 = vmatpush2.msra.mxu0 0.0
    %103 = vmatprep.subr.mxu0 0.0
    %104 = vmatpush2.msra.mxu0 0.0
    %105 = vmatprep.subr.mxu0 0.0
    %106 = vmatpush2.msra.mxu0 0.0
    %107 = vmatprep.subr.mxu0 0.0
    %108 = vmatpush2.msra.mxu0 0.0
    %109 = vmatprep.subr.mxu0 0.0
    %110 = vmatpush2.msra.mxu0 0.0
    %111 = vmatprep.subr.mxu0 0.0
    %112 = vmatpush2.msra.mxu0 0.0
    %113 = vmatprep.mubr.f32.mxu0 0.0
    %114 = vmatmul.mubr.f32.gmra.mxu0 %v47
    %v115 = vpop.f32.mrf.mxu0
    %v116 = vadd.f32 %v43, %v115
    %v117 = vpop.f32.mrf.mxu0
    %118 = vdwg.mxu0
    %vm119 = vcmask 123904
    %v120 = vsel %vm119, %v116, 0.0
    %121 = vadd.xlane.f32.xlu0 %v120
    %v122 = vpop.xlane.xlu0 %121
    %v123 = vrcp.pop 16.0
    %v124 = vmul.f32 %v122, %v123
    %v125 = vsub.f32 %v116, %v124
    %v126 = vmul.f32 %v125, %v125
    %v127 = vsel %vm119, %v126, 0.0
    %128 = vadd.xlane.f32.xlu0 %v127
    %v129 = vpop.xlane.xlu0 %128
    %v130 = vmul.f32 %v129, %v123
    %v131 = vadd.f32 %v130, 1e-05
    %v132 = vrsqrt.pop %v131
    %v133 = vmul.f32 %v125, %v132
    %v134 = vld [vmem:[%s3] sm:$0x1]
    %v136 = vlaneseq
    %v137 = vshrl.u32 %v136, 7
    %v138 = vsub.s32 0, %v137
    %v139 = vrot.slane %v134, %v138
    %v141 = vmul.f32 %v133, %v139
    %v142 = vld [vmem:[%s4] sm:$0x1]
    %v144 = vlaneseq
    %v145 = vshrl.u32 %v144, 7
    %v146 = vsub.s32 0, %v145
    %v147 = vrot.slane %v142, %v146
    %v149 = vadd.f32 %v141, %v147
    %v150 = vtanh.pop %v149
    %v151 = vld [vmem:[%s5] sm:$0x1]
    %v152 = vld [vmem:[#allocation2] sm:$0x1]
    %154 = vset.pattern.permute.xlu0 0
    %155 = vperm.xlu0 %154, %v152
    %v156 = vpop.permute.xlu0 %155
    %v158 = vlaneseq
    %v159 = vshrl.u32 %v158, 7
    %v160 = vsub.s32 0, %v159
    %v161 = vrot.slane %v156, %v160
    %vm162 = vcmask 130048
    %v164 = vsel %vm162, %v151, 0
    %v167 = vsel %vm162, %v150, 0
    %169 = vmatprep.subr.mxu0 0.0
    %170 = vmatpush1.xpose.msra.mxu0 0.0
    %171 = vmatprep.subr.mxu0 0.0
    %172 = vmatpush1.xpose.msra.mxu0 0.0
    %173 = vmatprep.subr.mxu0 0.0
    %174 = vmatpush1.xpose.msra.mxu0 0.0
    %175 = vmatprep.subr.mxu0 0.0
    %176 = vmatpush1.xpose.msra.mxu0 0.0
    %177 = vmatprep.subr.mxu0 0.0
    %178 = vmatpush1.xpose.msra.mxu0 0.0
    %179 = vmatprep.subr.mxu0 0.0
    %180 = vmatpush1.xpose.msra.mxu0 0.0
    %181 = vmatprep.subr.mxu0 0.0
    %182 = vmatpush1.xpose.msra.mxu0 0.0
    %183 = vmatprep.subr.mxu0 0.0
    %184 = vmatpush1.xpose.msra.mxu0 0.0
    %185 = vmatprep.subr.mxu0 0.0
    %186 = vmatpush1.xpose.msra.mxu0 0.0
    %187 = vmatprep.subr.mxu0 0.0
    %188 = vmatpush1.xpose.msra.mxu0 0.0
    %189 = vmatprep.subr.mxu0 0.0
    %190 = vmatpush1.xpose.msra.mxu0 0.0
    %191 = vmatprep.subr.mxu0 0.0
    %192 = vmatpush1.xpose.msra.mxu0 0.0
    %193 = vmatprep.subr.mxu0 0.0
    %194 = vmatpush1.xpose.msra.mxu0 0.0
    %195 = vmatprep.subr.mxu0 0.0
    %196 = vmatpush1.xpose.msra.mxu0 0.0
    %197 = vmatprep.subr.mxu0 0.0
    %198 = vmatpush1.xpose.msra.mxu0 0.0
    %199 = vmatprep.subr.mxu0 0.0
    %200 = vmatpush1.xpose.msra.mxu0 %v167
    %201 = vmatprep.subr.mxu0 0.0
    %202 = vmatpush2.xpose.msra.mxu0 0.0
    %203 = vmatprep.subr.mxu0 0.0
    %204 = vmatpush2.xpose.msra.mxu0 0.0
    %205 = vmatprep.subr.mxu0 0.0
    %206 = vmatpush2.xpose.msra.mxu0 0.0
    %207 = vmatprep.subr.mxu0 0.0
    %208 = vmatpush2.xpose.msra.mxu0 0.0
    %209 = vmatprep.subr.mxu0 0.0
    %210 = vmatpush2.xpose.msra.mxu0 0.0
    %211 = vmatprep.subr.mxu0 0.0
    %212 = vmatpush2.xpose.msra.mxu0 0.0
    %213 = vmatprep.subr.mxu0 0.0
    %214 = vmatpush2.xpose.msra.mxu0 0.0
    %215 = vmatprep.subr.mxu0 0.0
    %216 = vmatpush2.xpose.msra.mxu0 0.0
    %217 = vmatprep.subr.mxu0 0.0
    %218 = vmatpush2.xpose.msra.mxu0 0.0
    %219 = vmatprep.subr.mxu0 0.0
    %220 = vmatpush2.xpose.msra.mxu0 0.0
    %221 = vmatprep.subr.mxu0 0.0
    %222 = vmatpush2.xpose.msra.mxu0 0.0
    %223 = vmatprep.subr.mxu0 0.0
    %224 = vmatpush2.xpose.msra.mxu0 0.0
    %225 = vmatprep.subr.mxu0 0.0
    %226 = vmatpush2.xpose.msra.mxu0 0.0
    %227 = vmatprep.subr.mxu0 0.0
    %228 = vmatpush2.xpose.msra.mxu0 0.0
    %229 = vmatprep.subr.mxu0 0.0
    %230 = vmatpush2.xpose.msra.mxu0 0.0
    %231 = vmatprep.subr.mxu0 0.0
    %232 = vmatpush2.xpose.msra.mxu0 0.0
    %233 = vmatprep.mubr.f32.mxu0 0.0
    %234 = vmatmul.mubr.f32.gmra.mxu0 %v164
    %v235 = vpop.f32.mrf.mxu0
    %v236 = vadd.f32 %v161, %v235
    %v237 = vpop.f32.mrf.mxu0
    %238 = vdwg.mxu0
    %v239 = vmul.f32 %v236, 0.5
    %v240 = vtanh.pop %v239
    %v241 = vadd.f32 %v240, 1.0
    %v242 = vmul.f32 %v241, 0.5
    %vm243 = vcmask 8192
    %244 = vst.msk [vmem:[#allocation3] sm:$0x1] %vm243, %v242
    // Predicated region
    $region30: #{tpu_custom_call.1} parent=1 // pred_check
      _
    $region31: #{tpu_custom_call.1} parent=1 // pred_check_branch
      %246 = sbr.rel (0) target = $region33
    $region32: #{tpu_custom_call.1} parent=1 // pred_region
      %s248 = ssub.s32 16, 16
      %249 = vsyncadd [#allocation4], %s248
      %s251 = sshll.u32 [#allocation3], 4
      %s252 = int_to_ptr.vmem [resolvable:$true] %s251
      %254 = dma.vmem_to_hbm [thread:$0]  %s252, 16, %s7, [#allocation4]
    $region33: #{tpu_custom_call.1} parent=1 // pred_fallthru
      _
    // Predicated region
    $region34: #{tpu_custom_call.1} parent=1 // pred_check
      _
    $region35: #{tpu_custom_call.1} parent=1 // pred_check_branch
      %256 = sbr.rel (0) target = $region37
    $region36: #{tpu_custom_call.1} parent=1 // pred_region
      %257 = dma.done [#allocation4], 16
    $region37: #{tpu_custom_call.1} parent=1 // pred_fallthru
      _
    %258 = vsyncpa [#allocation4], 1

</llo_original>
